<compile_context>
chip_gen: v5e
topology: v5e:2x2
jax: 0.10.0
libtpu: 0.0.40
codegen_flags: <defaults>
</compile_context>

<pallas_src>
import functools

import jax
import jax.numpy as jnp
from jax.experimental import pallas as pl
from jax.experimental.pallas import tpu as pltpu

LANES = 128
SUBLANES = 8


def _l1_kernel(yhat_ref, y_ref, out_ref, acc_ref, *,
               inv_count, rows_total, block_rows, blocks_per_core, mask_rows):
    c = pl.program_id(0)          # "parallel" axis (megacore split on v7x)
    i = pl.program_id(1)          # "arbitrary" reduction axis
    nsteps = pl.num_programs(1)

    @pl.when(i == 0)
    def _():
        acc_ref[...] = jnp.zeros_like(acc_ref)

    # f32 compute path (mandatory on v5e; cheap everywhere, exact for the sum).
    d = jnp.abs(yhat_ref[...].astype(jnp.float32) - y_ref[...].astype(jnp.float32))

    if mask_rows:
        # Ragged tail block and/or the single clamped "phantom" block: zero any
        # rows past the real row count so they contribute nothing to the sum.
        gb = c * blocks_per_core + i
        row_ids = gb * block_rows + jax.lax.broadcasted_iota(jnp.int32, d.shape, 0)
        d = jnp.where(row_ids < rows_total, d, 0.0)

    if block_rows % SUBLANES == 0:
        # Sublane/lane-aligned partial sums: stays on the VPU, no per-step
        # cross-lane (XLU) reduction, no scalar round-trip, no serial SMEM dep.
        acc_ref[...] += d.reshape(-1, SUBLANES, LANES).sum(axis=0)
    else:
        # Tiny single-block case (rows < 8 -> grid == (1, 1)).
        acc_ref[...] += jnp.sum(d, axis=0, keepdims=True)

    @pl.when(i == nsteps - 1)
    def _():
        # Write the scaled per-core accumulator (lane-dense (acc_rows,128)
        # block); the final tiny cross-lane reduce happens outside the kernel.
        out_ref[0] = acc_ref[...] * inv_count


def l1_loss(yhat, y, *, max_block_rows=4096, num_cores=2):
    assert yhat.shape == y.shape, "L1 loss expects matching shapes (no broadcasting)"
    n_elems = int(yhat.size)

    flat_yhat = yhat.reshape(-1)
    flat_y = y.reshape(-1)

    # Lane alignment: pad only when N is not a multiple of 128 (<=127 zeros).
    # Zero padding on both operands contributes |0-0| = 0, so the sum is exact;
    # the mean still divides by the ORIGINAL element count.
    rem = n_elems % LANES
    if rem:
        pad = LANES - rem
        flat_yhat = jnp.pad(flat_yhat, (0, pad))
        flat_y = jnp.pad(flat_y, (0, pad))

    rows = flat_yhat.shape[0] // LANES
    slab_yhat = flat_yhat.reshape(rows, LANES)
    slab_y = flat_y.reshape(rows, LANES)

    # Block selection: whole slab in one block when small; otherwise large
    # (multiple-of-8) row blocks. 4096 rows -> 2 MiB f32 per input block;
    # double-buffered 2 inputs -> 8 MiB resident (safe at default scoped-VMEM
    # limits on v5e/v6e/v7x).
    block_rows = rows if rows <= max_block_rows else max_block_rows
    num_blocks = int(pl.cdiv(rows, block_rows))

    # 2-way TensorCore split (v7x megacore) only when every core gets >= 2
    # blocks of work; on 1-TC chips the size-2 "parallel" axis just serializes
    # (one extra accumulator init/finalize, negligible for a mem-bound kernel).
    cores = num_cores if num_blocks >= 2 * num_cores else 1
    bpc = int(pl.cdiv(num_blocks, cores))
    have_phantom = cores * bpc != num_blocks
    mask_rows = (rows % block_rows != 0) or have_phantom

    acc_rows = SUBLANES if block_rows % SUBLANES == 0 else 1

    def data_map(c, i):
        b = c * bpc + i
        if have_phantom:
            # At most one phantom block (odd block count): clamp its index so
            # the DMA stays in bounds; its rows are zeroed by the in-kernel mask.
            b = jnp.minimum(b, num_blocks - 1)
        return (b, 0)

    kernel = functools.partial(
        _l1_kernel,
        inv_count=1.0 / n_elems,            # Python float -> folded literal
        rows_total=rows,
        block_rows=block_rows,
        blocks_per_core=bpc,
        mask_rows=mask_rows,
    )

    out = pl.pallas_call(
        kernel,
        out_shape=jax.ShapeDtypeStruct((cores, acc_rows, LANES), jnp.float32),
        grid_spec=pltpu.PrefetchScalarGridSpec(
            num_scalar_prefetch=0,
            grid=(cores, bpc),
            in_specs=[
                pl.BlockSpec((block_rows, LANES), data_map),
                pl.BlockSpec((block_rows, LANES), data_map),
            ],
            out_specs=pl.BlockSpec((1, acc_rows, LANES), lambda c, i: (c, 0, 0)),
            scratch_shapes=[pltpu.VMEM((acc_rows, LANES), jnp.float32)],
        ),
        compiler_params=pltpu.CompilerParams(
            dimension_semantics=("parallel", "arbitrary"),
        ),
    )(slab_yhat, slab_y)

    # Final tiny reduce of the per-core scaled partials (at most 2*8*128 f32).
    return jnp.sum(out)


if __name__ == "__main__":
    key = jax.random.PRNGKey(0)
    k1, k2 = jax.random.split(key)
    # Small NCHW-like shapes, consistent with a typical regression target.
    yhat = jax.random.normal(k1, (2, 4, 16, 16), dtype=jnp.float32)
    y = jax.random.normal(k2, (2, 4, 16, 16), dtype=jnp.float32)

    loss = jax.block_until_ready(l1_loss(yhat, y))

    # Reference check (same semantics as torch.mean(torch.abs(yHat - y))).
    ref = jnp.mean(jnp.abs(yhat - y))
    assert jnp.allclose(loss, ref, rtol=1e-6, atol=1e-6), (loss, ref)
    print("KERNEL_OK")
</pallas_src>

<mosaic_0001>
module attributes {stable_mosaic.version = 11 : i64} {
  func.func @_l1_kernel(%arg0: i32, %arg1: i32, %arg2: memref<16x128xf32, #tpu.memory_space<vmem>>, %arg3: memref<16x128xf32, #tpu.memory_space<vmem>>, %arg4: memref<1x8x128xf32, #tpu.memory_space<vmem>>, %arg5: memref<8x128xf32, #tpu.memory_space<vmem>>) attributes {dimension_semantics = [#tpu.dimension_semantics<parallel>, #tpu.dimension_semantics<arbitrary>], iteration_bounds = array<i64: 1, 1>, scalar_prefetch = 0 : i64, scratch_operands = 1 : i64, tpu.core_type = #tpu.core_type<tc>, window_params = [{transform_indices = @transform_0, window_bounds = array<i64: 16, 128>}, {transform_indices = @transform_1, window_bounds = array<i64: 16, 128>}, {transform_indices = @transform_2, window_bounds = array<i64: 1, 8, 128>}]} {
    %c0_i32 = arith.constant 0 : i32
    %0 = arith.cmpi eq, %arg1, %c0_i32 : i32
    %1 = arith.extui %0 : i1 to i32
    %c0_i32_0 = arith.constant 0 : i32
    %2 = arith.cmpi ne, %1, %c0_i32_0 : i32
    scf.if %2 {
      %cst_10 = arith.constant 0.000000e+00 : f32
      %15 = vector.broadcast %cst_10 : f32 to vector<8x128xf32>
      %c0_11 = arith.constant 0 : index
      %c0_12 = arith.constant 0 : index
      %16 = vector.load %arg5[%c0_11, %c0_12] : memref<8x128xf32, #tpu.memory_space<vmem>>, vector<8x128xf32>
      tpu.vector_store %arg5[%c0_11, %c0_12], %15 {strides = array<i32>} : memref<8x128xf32, #tpu.memory_space<vmem>>, vector<8x128xf32>,
    } else {
    }
    %c0 = arith.constant 0 : index
    %c0_1 = arith.constant 0 : index
    %3 = vector.load %arg2[%c0, %c0_1] : memref<16x128xf32, #tpu.memory_space<vmem>>, vector<16x128xf32>
    %c0_2 = arith.constant 0 : index
    %c0_3 = arith.constant 0 : index
    %4 = vector.load %arg3[%c0_2, %c0_3] : memref<16x128xf32, #tpu.memory_space<vmem>>, vector<16x128xf32>
    %5 = arith.subf %3, %4 : vector<16x128xf32>
    %6 = math.absf %5 : vector<16x128xf32>
    %c0_4 = arith.constant 0 : index
    %c0_5 = arith.constant 0 : index
    %7 = vector.load %arg5[%c0_4, %c0_5] : memref<8x128xf32, #tpu.memory_space<vmem>>, vector<8x128xf32>
    %8 = vector.shape_cast %6 : vector<16x128xf32> to vector<2x8x128xf32>
    %cst = arith.constant dense<0.000000e+00> : vector<8x128xf32>
    %9 = vector.multi_reduction <add>, %8, %cst [0] : vector<2x8x128xf32> to vector<8x128xf32>
    %10 = arith.addf %7, %9 : vector<8x128xf32>
    %c0_6 = arith.constant 0 : index
    %c0_7 = arith.constant 0 : index
    %11 = vector.load %arg5[%c0_6, %c0_7] : memref<8x128xf32, #tpu.memory_space<vmem>>, vector<8x128xf32>
    tpu.vector_store %arg5[%c0_6, %c0_7], %10 {strides = array<i32>} : memref<8x128xf32, #tpu.memory_space<vmem>>, vector<8x128xf32>,
    %c0_i32_8 = arith.constant 0 : i32
    %12 = arith.cmpi eq, %arg1, %c0_i32_8 : i32
    %13 = arith.extui %12 : i1 to i32
    %c0_i32_9 = arith.constant 0 : i32
    %14 = arith.cmpi ne, %13, %c0_i32_9 : i32
    scf.if %14 {
      %c0_10 = arith.constant 0 : index
      %c0_11 = arith.constant 0 : index
      %15 = vector.load %arg5[%c0_10, %c0_11] : memref<8x128xf32, #tpu.memory_space<vmem>>, vector<8x128xf32>
      %cst_12 = arith.constant 4.8828125E-4 : f32
      %16 = vector.broadcast %cst_12 : f32 to vector<8x128xf32>
      %17 = arith.mulf %15, %16 : vector<8x128xf32>
      %c0_13 = arith.constant 0 : index
      %c0_14 = arith.constant 0 : index
      %c0_15 = arith.constant 0 : index
      %18 = vector.load %arg4[%c0_13, %c0_14, %c0_15] : memref<1x8x128xf32, #tpu.memory_space<vmem>>, vector<1x8x128xf32>
      %19 = vector.shape_cast %18 : vector<1x8x128xf32> to vector<8x128xf32>
      %20 = vector.shape_cast %17 : vector<8x128xf32> to vector<1x8x128xf32>
      tpu.vector_store %arg4[%c0_13, %c0_14, %c0_15], %20 {strides = array<i32>} : memref<1x8x128xf32, #tpu.memory_space<vmem>>, vector<1x8x128xf32>,
    } else {
    }
    return
  }
  func.func @transform_0(%arg0: i32, %arg1: i32) -> (i32, i32) {
    %c1_i32 = arith.constant 1 : i32
    %0 = arith.muli %arg0, %c1_i32 : i32
    %1 = arith.addi %0, %arg1 : i32
    %c0_i32 = arith.constant 0 : i32
    %c0_i32_0 = arith.constant 0 : i32
    return %1, %c0_i32 : i32, i32
  }
  func.func @transform_1(%arg0: i32, %arg1: i32) -> (i32, i32) {
    %c1_i32 = arith.constant 1 : i32
    %0 = arith.muli %arg0, %c1_i32 : i32
    %1 = arith.addi %0, %arg1 : i32
    %c0_i32 = arith.constant 0 : i32
    %c0_i32_0 = arith.constant 0 : i32
    return %1, %c0_i32 : i32, i32
  }
  func.func @transform_2(%arg0: i32, %arg1: i32) -> (i32, i32, i32) {
    %c0_i32 = arith.constant 0 : i32
    %c0_i32_0 = arith.constant 0 : i32
    %c0_i32_1 = arith.constant 0 : i32
    return %arg0, %c0_i32, %c0_i32_0 : i32, i32, i32
  }
}

</mosaic_0001>

<llo_original>
// kernel: tpu_custom_call.1
$region0: #{tpu_custom_call.1}
  #allocation0 [shape = 'u32[]', space=smem, size = 0x4, offset = 0x4, fixed_abs, tag = 'smem constant byte address 0x4 - core index']
  #allocation1 [shape = 'u32[72,128]{1,0:T(1,128)}', space=vmem, size = 0x9000, scoped, tag = 'internal scratch']
  #allocation2 [shape = 'f32[8,128]{1,0:T(8,128)}', space=vmem, size = 0x1000, scoped, tag = 'scratch operand']
  %s0 = inlined_call_operand.hbm [shape: f32[16,128], index: 0, kind: input, shape index: {}]
  %s1 = inlined_call_operand.hbm [shape: f32[16,128], index: 1, kind: input, shape index: {}]
  %s2 = inlined_call_operand.hbm [shape: f32[1,8,128], index: 2, kind: output, shape index: {}]
  %s3 = sld [smem:[#allocation0]]
  $region34: #{tpu_custom_call.1} parent=0
    _
  %s5 = ssub.s32 1, %s3
  %s6 = scalar_select 0, %s5, %s3
  $region1: #{tpu_custom_call.1} parent=0
    #allocation3 [shape = 'u8[8192]{0}', space=vmem, size = 0x2000, scoped, tag = 'input window, operand 0, single buffered']
    #allocation4 [shape = 's32[1]{0}', space=sflag, size = 0x4, scoped, tag = 'scoped memory for tpu_custom_call.1']
    #allocation5 [shape = 's32[1]{0}', space=sflag, size = 0x4, scoped, tag = 'scoped memory for tpu_custom_call.1']
    #allocation6 [shape = 'u8[8192]{0}', space=vmem, size = 0x2000, scoped, tag = 'input window, operand 1, single buffered']
    #allocation7 [shape = 's32[1]{0}', space=sflag, size = 0x4, scoped, tag = 'scoped memory for tpu_custom_call.1']
    #allocation8 [shape = 'u8[4096]{0}', space=vmem, size = 0x1000, scoped, tag = 'output window, operand 0, single buffered']
    %7 = vsyncpa [#allocation4], 0
    %8 = vsyncpa [#allocation7], 0
    %9 = vsyncpa [#allocation5], 0
    // Predicated region
    $region2: #{tpu_custom_call.1} parent=1 // pred_check
      _
    $region3: #{tpu_custom_call.1} parent=1 // pred_check_branch
      %11 = sbr.rel (0) target = $region5
    $region4: #{tpu_custom_call.1} parent=1 // pred_region
      %s12 = sadd.s32 0, 0
      %s13 = smul.u32 2, %s12
      %15 = vsyncadd [#allocation4], 0
      %s16 = smul.addr %s13, 8
      %s17 = scalar_lea.hbm %s0, %s16
      %s18 = sshll.u32 %s17, 4
      %s19 = int_to_ptr.hbm [resolvable:$true] %s18
      %s20 = sshll.u32 [#allocation3], 4
      %s21 = int_to_ptr.vmem [resolvable:$true] %s20
      %26 = dma.hbm_to_vmem [thread:$0]  %s19, 256, %s21, [#allocation4], 128, 128, 8
    $region5: #{tpu_custom_call.1} parent=1 // pred_fallthru
      _
    // Predicated region
    $region6: #{tpu_custom_call.1} parent=1 // pred_check
      _
    $region7: #{tpu_custom_call.1} parent=1 // pred_check_branch
      %28 = sbr.rel (0) target = $region9
    $region8: #{tpu_custom_call.1} parent=1 // pred_region
      %s29 = sadd.s32 0, 0
      %s30 = smul.u32 2, %s29
      %32 = vsyncadd [#allocation7], 0
      %s33 = smul.addr %s30, 8
      %s34 = scalar_lea.hbm %s1, %s33
      %s35 = sshll.u32 %s34, 4
      %s36 = int_to_ptr.hbm [resolvable:$true] %s35
      %s37 = sshll.u32 [#allocation6], 4
      %s38 = int_to_ptr.vmem [resolvable:$true] %s37
      %43 = dma.hbm_to_vmem [thread:$0]  %s36, 256, %s38, [#allocation7], 128, 128, 8
    $region9: #{tpu_custom_call.1} parent=1 // pred_fallthru
      _
    // Predicated region
    $region10: #{tpu_custom_call.1} parent=1 // pred_check
      _
    $region11: #{tpu_custom_call.1} parent=1 // pred_check_branch
      %45 = sbr.rel (0) target = $region13
    $region12: #{tpu_custom_call.1} parent=1 // pred_region
      %47 = dma.done [#allocation4], 256
    $region13: #{tpu_custom_call.1} parent=1 // pred_fallthru
      _
    // Predicated region
    $region14: #{tpu_custom_call.1} parent=1 // pred_check
      _
    $region15: #{tpu_custom_call.1} parent=1 // pred_check_branch
      %49 = sbr.rel (0) target = $region17
    $region16: #{tpu_custom_call.1} parent=1 // pred_region
      %51 = dma.done [#allocation7], 256
    $region17: #{tpu_custom_call.1} parent=1 // pred_fallthru
      _
    %s52 = sadd.s32 0, 0
    %s53 = smul.u32 2, %s52
    %s54 = sadd.s32 0, 0
    %s55 = smul.u32 2, %s54
    %p56 = scmp.eq.s32.totalorder 0, 0
    // Predicated region
    $region18: #{tpu_custom_call.1} parent=1 // pred_check
      %p57 = pneg %p56
    $region19: #{tpu_custom_call.1} parent=1 // pred_check_branch
      %59 = sbr.rel (%p57) target = $region21
    $region20: #{tpu_custom_call.1} parent=1 // pred_region
      %60 = vst [vmem:[#allocation2] sm:$0xff] 0.0
    $region21: #{tpu_custom_call.1} parent=1 // pred_fallthru
      _
    %v61 = vld [vmem:[#allocation3] sm:$0xff]
    %v62 = vld [vmem:[#allocation3 + $0x8] sm:$0xff]
    %v63 = vld [vmem:[#allocation6] sm:$0xff]
    %v64 = vld [vmem:[#allocation6 + $0x8] sm:$0xff]
    %v65 = vsub.f32 %v61, %v63
    %v66 = vsub.f32 %v62, %v64
    %v67 = vand.u32 2147483647, %v65
    %v68 = vand.u32 2147483647, %v66
    %v69 = vld [vmem:[#allocation2] sm:$0xff]
    %v70 = vadd.f32 %v67, %v68
    %v71 = vadd.f32 %v69, %v70
    %72 = vst [vmem:[#allocation2] sm:$0xff] %v71
    // Predicated region
    $region22: #{tpu_custom_call.1} parent=1 // pred_check
      %p73 = pneg %p56
    $region23: #{tpu_custom_call.1} parent=1 // pred_check_branch
      %75 = sbr.rel (%p73) target = $region25
    $region24: #{tpu_custom_call.1} parent=1 // pred_region
      %v76 = vld [vmem:[#allocation2] sm:$0xff]
      %v77 = vmul.f32 %v76, 0.00048828125
      %78 = vst [vmem:[#allocation8] sm:$0xff] %v77
    $region25: #{tpu_custom_call.1} parent=1 // pred_fallthru
      _
    // Predicated region
    $region26: #{tpu_custom_call.1} parent=1 // pred_check
      _
    $region27: #{tpu_custom_call.1} parent=1 // pred_check_branch
      %80 = sbr.rel (0) target = $region29
    $region28: #{tpu_custom_call.1} parent=1 // pred_region
      %82 = vsyncadd [#allocation5], 0
      %s84 = sshll.u32 [#allocation8], 4
      %s85 = int_to_ptr.vmem [resolvable:$true] %s84
      %s86 = sshll.u32 %s2, 4
      %s87 = int_to_ptr.hbm [resolvable:$true] %s86
      %89 = dma.vmem_to_hbm [thread:$0]  %s85, 128, %s87, [#allocation5]
    $region29: #{tpu_custom_call.1} parent=1 // pred_fallthru
      _
    // Predicated region
    $region30: #{tpu_custom_call.1} parent=1 // pred_check
      _
    $region31: #{tpu_custom_call.1} parent=1 // pred_check_branch
      %91 = sbr.rel (0) target = $region33
    $region32: #{tpu_custom_call.1} parent=1 // pred_region
      %93 = dma.done [#allocation5], 128
    $region33: #{tpu_custom_call.1} parent=1 // pred_fallthru
      _
    %94 = vsyncpa [#allocation4], 1
    %95 = vsyncpa [#allocation7], 1
    %96 = vsyncpa [#allocation5], 1

</llo_original>
